<compile_context>
chip_gen: v6e
topology: v6e:2x2x1
jax: 0.10.0
libtpu: 0.0.40
codegen_flags: <defaults>
</compile_context>

<pallas_src>
import functools
import math

import jax
import jax.numpy as jnp
from jax.experimental import pallas as pl
from jax.experimental.pallas import tpu as pltpu


# ----------------------------- Pallas kernel ------------------------------- #
def _dynamics_kernel(ff_ref, w_ref, r0_ref, rec0_ref, params_ref, out_ref,
                     *, n_steps, n_steady, n_window):
    """Runs the full update_dynamics() recurrence + windowed averaging.

    ff_ref     : (N_STEPS, B, N)  feed-forward input, VMEM-resident
    w_ref      : (N, N)           Wab_T (GAIN folded), VMEM-resident
    r0_ref     : (B, N)           rates from initRates()
    rec0_ref   : (B, N)           rec_input[0] from initRates()
    params_ref : (8, N)           rows 0..4 = EXP_DT_TAU_SYN, DT_TAU_SYN,
                                  EXP_DT_TAU, DT_TAU, thresh
    out_ref    : (N_WINDOWS, B, N) window-averaged rates
    """
    # Hoist loop invariants: weight tile + one vreg of packed per-neuron params.
    w = w_ref[...]
    params = params_ref[...]
    exp_syn = params[0:1, :]          # (1, N) -> broadcast against (B, N)
    dt_syn = params[1:2, :]
    exp_tau = params[2:3, :]
    dt_tau = params[3:4, :]
    thresh = params[4:5, :]

    rates = r0_ref[...]               # carried in vregs (one (8,128) vreg each)
    rec = rec0_ref[...]
    mv = jnp.zeros_like(rates)
    inv_window = jnp.float32(1.0 / n_window)

    # TODO(synk): could hold the (N,N) RHS in MXU weight registers across steps
    #             via pltpu.matmul_push_rhs / matmul_acc_lhs / matmul_pop.
    w_idx = 0
    for step in range(n_steps):       # fully unrolled; window logic is static
        # hidden = rates @ Wab_T   (MXU)
        hidden = jnp.dot(rates, w, preferred_element_type=jnp.float32)
        # SYN_DYN: rec = rec * EXP_DT_TAU_SYN + hidden * DT_TAU_SYN
        rec = rec * exp_syn + hidden * dt_syn
        # net_input = ff + rec ; thresholded relu
        net = ff_ref[step] + rec
        non_linear = jnp.maximum(net - thresh, 0.0)
        # RATE_DYN: rates = rates * EXP_DT_TAU + non_linear * DT_TAU
        rates = rates * exp_tau + non_linear * dt_tau

        # ---- fused windowed averaging (mirrors the PyTorch loop exactly) ----
        mv = mv + rates
        if step == n_steady - n_window - 1:
            mv = jnp.zeros_like(rates)
        if step >= n_steady and step % n_window == 0:
            out_ref[w_idx] = mv * inv_window
            w_idx += 1
            mv = jnp.zeros_like(rates)


def run_dynamics(ff_input_tm, w_T, rates0, rec0, params, n_steady, n_window):
    """ff_input_tm: (N_STEPS, N_BATCH, N_NEURON).

    Returns window-averaged rates of shape (N_WINDOWS, N_BATCH, N_NEURON).
    """
    n_steps, n_batch, n_neuron = ff_input_tm.shape
    n_windows = sum(1 for s in range(n_steps)
                    if s >= n_steady and s % n_window == 0)

    kernel = functools.partial(_dynamics_kernel, n_steps=n_steps,
                               n_steady=n_steady, n_window=n_window)
    vmem_spec = pl.BlockSpec(memory_space=pltpu.MemorySpace.VMEM)

    return pl.pallas_call(
        kernel,
        out_shape=jax.ShapeDtypeStruct((n_windows, n_batch, n_neuron),
                                       jnp.float32),
        in_specs=[vmem_spec] * 5,
        out_specs=vmem_spec,
    )(ff_input_tm, w_T, rates0, rec0, params)


# ------------------------------- Wrapper ------------------------------------ #
class NetworkPallas:
    """Minimal deterministic re-implementation of Network.forward (dense config)."""

    def __init__(self, key):
        # ---- config (synthetic, small) ----
        self.N_BATCH = 8
        self.Na = [96, 32]                      # E / I populations
        self.N_NEURON = sum(self.Na)            # 128
        self.Ka = [24.0, 8.0]
        self.N_STEPS = 12
        self.N_STEADY = 4
        self.N_WINDOW = 2
        self.GAIN = 1.0
        self.DT = 0.1
        TAU = [0.20, 0.10]
        TAU_SYN = [0.40, 0.20]
        self.Jab = jnp.array([[1.0, -1.5], [1.0, -1.0]], dtype=jnp.float32)
        THRESH = [1.0, 1.0]

        # per-neuron time-constant / threshold vectors (N_NEURON,)
        def per_neuron(vals):
            return jnp.concatenate([jnp.full((n,), float(x), jnp.float32)
                                    for n, x in zip(self.Na, vals)])

        exp_dt_tau_syn = per_neuron([math.exp(-self.DT / t) for t in TAU_SYN])
        dt_tau_syn = per_neuron([self.DT / t for t in TAU_SYN])
        exp_dt_tau = per_neuron([math.exp(-self.DT / t) for t in TAU])
        dt_tau = per_neuron([self.DT / t for t in TAU])
        self.thresh = per_neuron(THRESH)

        # pack the five invariant per-neuron vectors into one (8, N) tile
        params = jnp.zeros((8, self.N_NEURON), jnp.float32)
        params = params.at[0].set(exp_dt_tau_syn)
        params = params.at[1].set(dt_tau_syn)
        params = params.at[2].set(exp_dt_tau)
        params = params.at[3].set(dt_tau)
        params = params.at[4].set(self.thresh)
        self.params = params

        # ---- initWeights(): block-structured sparse random connectivity ----
        kw, = jax.random.split(key, 1)
        Wab = jnp.zeros((self.N_NEURON, self.N_NEURON), jnp.float32)
        offs = [0, self.Na[0], self.N_NEURON]
        for i in range(2):
            for j in range(2):
                kw, kb = jax.random.split(kw)
                p = self.Ka[j] / self.Na[j]
                conn = jax.random.bernoulli(
                    kb, p, (self.Na[i], self.Na[j])).astype(jnp.float32)
                block = (self.Jab[i, j] / jnp.sqrt(self.Ka[j])) * conn
                Wab = Wab.at[offs[i]:offs[i + 1], offs[j]:offs[j + 1]].set(block)
        self.Wab_T = Wab.T                                  # SPARSE == 'dense' branch

    def forward(self, ff_input, key):
        """ff_input: (N_BATCH, N_STEPS, N_NEURON). Returns (N_BATCH, N_WINDOWS, Na[0])."""
        B, S, N = ff_input.shape

        # ---- initRates() ----
        rec0 = jax.random.normal(key, (B, N), jnp.float32)          # rec_input[0]
        rates0 = jnp.maximum(ff_input[:, 0] + rec0 - self.thresh[None, :], 0.0)

        Wab_T_eff = (self.GAIN * self.Wab_T).astype(jnp.float32)

        # ---- recurrent dynamics + fused windowed averaging, all in Pallas ----
        ff_tm = jnp.transpose(ff_input, (1, 0, 2)).astype(jnp.float32)
        win = run_dynamics(ff_tm, Wab_T_eff, rates0, rec0, self.params,
                           self.N_STEADY, self.N_WINDOW)
        # win: (N_WINDOWS, N_BATCH, N_NEURON) -> (N_BATCH, N_WINDOWS, Na[0])
        return jnp.transpose(win, (1, 0, 2))[:, :, :self.Na[0]]


# --------------------------------- main -------------------------------------- #
if __name__ == "__main__":
    key = jax.random.PRNGKey(0)
    k_net, k_ff, k_rec = jax.random.split(key, 3)

    net = NetworkPallas(k_net)

    # deterministic feed-forward input: baseline drive + small noise
    ff_input = 2.0 + 0.1 * jax.random.normal(
        k_ff, (net.N_BATCH, net.N_STEPS, net.N_NEURON), jnp.float32)

    rates = net.forward(ff_input, k_rec)
    rates = jax.block_until_ready(rates)

    assert rates.shape == (net.N_BATCH, 4, net.Na[0])
    assert bool(jnp.all(jnp.isfinite(rates)))
    print("KERNEL_OK")
</pallas_src>

<mosaic_0001>
module attributes {stable_mosaic.version = 11 : i64} {
  func.func @_dynamics_kernel(%arg0: memref<12x8x128xf32, #tpu.memory_space<vmem>>, %arg1: memref<128x128xf32, #tpu.memory_space<vmem>>, %arg2: memref<8x128xf32, #tpu.memory_space<vmem>>, %arg3: memref<8x128xf32, #tpu.memory_space<vmem>>, %arg4: memref<8x128xf32, #tpu.memory_space<vmem>>, %arg5: memref<4x8x128xf32, #tpu.memory_space<vmem>>) attributes {dimension_semantics = [], scalar_prefetch = 0 : i64, scratch_operands = 0 : i64, tpu.core_type = #tpu.core_type<tc>} {
    %c0 = arith.constant 0 : index
    %c0_0 = arith.constant 0 : index
    %0 = vector.load %arg1[%c0, %c0_0] : memref<128x128xf32, #tpu.memory_space<vmem>>, vector<128x128xf32>
    %c0_1 = arith.constant 0 : index
    %c0_2 = arith.constant 0 : index
    %1 = vector.load %arg4[%c0_1, %c0_2] : memref<8x128xf32, #tpu.memory_space<vmem>>, vector<8x128xf32>
    %2 = vector.extract_strided_slice %1 {offsets = [0, 0], sizes = [1, 128], strides = [1, 1]} : vector<8x128xf32> to vector<1x128xf32>
    %3 = vector.extract_strided_slice %1 {offsets = [1, 0], sizes = [1, 128], strides = [1, 1]} : vector<8x128xf32> to vector<1x128xf32>
    %4 = vector.extract_strided_slice %1 {offsets = [2, 0], sizes = [1, 128], strides = [1, 1]} : vector<8x128xf32> to vector<1x128xf32>
    %5 = vector.extract_strided_slice %1 {offsets = [3, 0], sizes = [1, 128], strides = [1, 1]} : vector<8x128xf32> to vector<1x128xf32>
    %6 = vector.extract_strided_slice %1 {offsets = [4, 0], sizes = [1, 128], strides = [1, 1]} : vector<8x128xf32> to vector<1x128xf32>
    %c0_3 = arith.constant 0 : index
    %c0_4 = arith.constant 0 : index
    %7 = vector.load %arg2[%c0_3, %c0_4] : memref<8x128xf32, #tpu.memory_space<vmem>>, vector<8x128xf32>
    %c0_5 = arith.constant 0 : index
    %c0_6 = arith.constant 0 : index
    %8 = vector.load %arg3[%c0_5, %c0_6] : memref<8x128xf32, #tpu.memory_space<vmem>>, vector<8x128xf32>
    %cst = arith.constant dense<0.000000e+00> : vector<8x128xf32>
    %9 = tpu.matmul %7, %0, %cst {dimension_numbers = #tpu.dot_dimension_numbers<[1], [0], [0], [1], [0, 0, 1, 1], [], []>} : vector<8x128xf32>, vector<128x128xf32>, vector<8x128xf32> -> vector<8x128xf32>
    %10 = vector.broadcast %2 : vector<1x128xf32> to vector<8x128xf32>
    %11 = arith.mulf %8, %10 : vector<8x128xf32>
    %12 = vector.broadcast %3 : vector<1x128xf32> to vector<8x128xf32>
    %13 = arith.mulf %9, %12 : vector<8x128xf32>
    %14 = arith.addf %11, %13 : vector<8x128xf32>
    %c0_7 = arith.constant 0 : index
    %c0_8 = arith.constant 0 : index
    %c0_9 = arith.constant 0 : index
    %15 = vector.load %arg0[%c0_7, %c0_8, %c0_9] : memref<12x8x128xf32, #tpu.memory_space<vmem>>, vector<1x8x128xf32>
    %16 = vector.shape_cast %15 : vector<1x8x128xf32> to vector<8x128xf32>
    %17 = arith.addf %16, %14 : vector<8x128xf32>
    %18 = vector.broadcast %6 : vector<1x128xf32> to vector<8x128xf32>
    %19 = arith.subf %17, %18 : vector<8x128xf32>
    %cst_10 = arith.constant 0.000000e+00 : f32
    %20 = vector.broadcast %cst_10 : f32 to vector<8x128xf32>
    %21 = arith.maximumf %19, %20 : vector<8x128xf32>
    %22 = vector.broadcast %4 : vector<1x128xf32> to vector<8x128xf32>
    %23 = arith.mulf %7, %22 : vector<8x128xf32>
    %24 = vector.broadcast %5 : vector<1x128xf32> to vector<8x128xf32>
    %25 = arith.mulf %21, %24 : vector<8x128xf32>
    %26 = arith.addf %23, %25 : vector<8x128xf32>
    %cst_11 = arith.constant dense<0.000000e+00> : vector<8x128xf32>
    %27 = tpu.matmul %26, %0, %cst_11 {dimension_numbers = #tpu.dot_dimension_numbers<[1], [0], [0], [1], [0, 0, 1, 1], [], []>} : vector<8x128xf32>, vector<128x128xf32>, vector<8x128xf32> -> vector<8x128xf32>
    %28 = vector.broadcast %2 : vector<1x128xf32> to vector<8x128xf32>
    %29 = arith.mulf %14, %28 : vector<8x128xf32>
    %30 = vector.broadcast %3 : vector<1x128xf32> to vector<8x128xf32>
    %31 = arith.mulf %27, %30 : vector<8x128xf32>
    %32 = arith.addf %29, %31 : vector<8x128xf32>
    %c1 = arith.constant 1 : index
    %c0_12 = arith.constant 0 : index
    %c0_13 = arith.constant 0 : index
    %33 = vector.load %arg0[%c1, %c0_12, %c0_13] : memref<12x8x128xf32, #tpu.memory_space<vmem>>, vector<1x8x128xf32>
    %34 = vector.shape_cast %33 : vector<1x8x128xf32> to vector<8x128xf32>
    %35 = arith.addf %34, %32 : vector<8x128xf32>
    %36 = vector.broadcast %6 : vector<1x128xf32> to vector<8x128xf32>
    %37 = arith.subf %35, %36 : vector<8x128xf32>
    %cst_14 = arith.constant 0.000000e+00 : f32
    %38 = vector.broadcast %cst_14 : f32 to vector<8x128xf32>
    %39 = arith.maximumf %37, %38 : vector<8x128xf32>
    %40 = vector.broadcast %4 : vector<1x128xf32> to vector<8x128xf32>
    %41 = arith.mulf %26, %40 : vector<8x128xf32>
    %42 = vector.broadcast %5 : vector<1x128xf32> to vector<8x128xf32>
    %43 = arith.mulf %39, %42 : vector<8x128xf32>
    %44 = arith.addf %41, %43 : vector<8x128xf32>
    %cst_15 = arith.constant 0.000000e+00 : f32
    %45 = vector.broadcast %cst_15 : f32 to vector<8x128xf32>
    %cst_16 = arith.constant dense<0.000000e+00> : vector<8x128xf32>
    %46 = tpu.matmul %44, %0, %cst_16 {dimension_numbers = #tpu.dot_dimension_numbers<[1], [0], [0], [1], [0, 0, 1, 1], [], []>} : vector<8x128xf32>, vector<128x128xf32>, vector<8x128xf32> -> vector<8x128xf32>
    %47 = vector.broadcast %2 : vector<1x128xf32> to vector<8x128xf32>
    %48 = arith.mulf %32, %47 : vector<8x128xf32>
    %49 = vector.broadcast %3 : vector<1x128xf32> to vector<8x128xf32>
    %50 = arith.mulf %46, %49 : vector<8x128xf32>
    %51 = arith.addf %48, %50 : vector<8x128xf32>
    %c2 = arith.constant 2 : index
    %c0_17 = arith.constant 0 : index
    %c0_18 = arith.constant 0 : index
    %52 = vector.load %arg0[%c2, %c0_17, %c0_18] : memref<12x8x128xf32, #tpu.memory_space<vmem>>, vector<1x8x128xf32>
    %53 = vector.shape_cast %52 : vector<1x8x128xf32> to vector<8x128xf32>
    %54 = arith.addf %53, %51 : vector<8x128xf32>
    %55 = vector.broadcast %6 : vector<1x128xf32> to vector<8x128xf32>
    %56 = arith.subf %54, %55 : vector<8x128xf32>
    %cst_19 = arith.constant 0.000000e+00 : f32
    %57 = vector.broadcast %cst_19 : f32 to vector<8x128xf32>
    %58 = arith.maximumf %56, %57 : vector<8x128xf32>
    %59 = vector.broadcast %4 : vector<1x128xf32> to vector<8x128xf32>
    %60 = arith.mulf %44, %59 : vector<8x128xf32>
    %61 = vector.broadcast %5 : vector<1x128xf32> to vector<8x128xf32>
    %62 = arith.mulf %58, %61 : vector<8x128xf32>
    %63 = arith.addf %60, %62 : vector<8x128xf32>
    %64 = arith.addf %45, %63 : vector<8x128xf32>
    %cst_20 = arith.constant dense<0.000000e+00> : vector<8x128xf32>
    %65 = tpu.matmul %63, %0, %cst_20 {dimension_numbers = #tpu.dot_dimension_numbers<[1], [0], [0], [1], [0, 0, 1, 1], [], []>} : vector<8x128xf32>, vector<128x128xf32>, vector<8x128xf32> -> vector<8x128xf32>
    %66 = vector.broadcast %2 : vector<1x128xf32> to vector<8x128xf32>
    %67 = arith.mulf %51, %66 : vector<8x128xf32>
    %68 = vector.broadcast %3 : vector<1x128xf32> to vector<8x128xf32>
    %69 = arith.mulf %65, %68 : vector<8x128xf32>
    %70 = arith.addf %67, %69 : vector<8x128xf32>
    %c3 = arith.constant 3 : index
    %c0_21 = arith.constant 0 : index
    %c0_22 = arith.constant 0 : index
    %71 = vector.load %arg0[%c3, %c0_21, %c0_22] : memref<12x8x128xf32, #tpu.memory_space<vmem>>, vector<1x8x128xf32>
    %72 = vector.shape_cast %71 : vector<1x8x128xf32> to vector<8x128xf32>
    %73 = arith.addf %72, %70 : vector<8x128xf32>
    %74 = vector.broadcast %6 : vector<1x128xf32> to vector<8x128xf32>
    %75 = arith.subf %73, %74 : vector<8x128xf32>
    %cst_23 = arith.constant 0.000000e+00 : f32
    %76 = vector.broadcast %cst_23 : f32 to vector<8x128xf32>
    %77 = arith.maximumf %75, %76 : vector<8x128xf32>
    %78 = vector.broadcast %4 : vector<1x128xf32> to vector<8x128xf32>
    %79 = arith.mulf %63, %78 : vector<8x128xf32>
    %80 = vector.broadcast %5 : vector<1x128xf32> to vector<8x128xf32>
    %81 = arith.mulf %77, %80 : vector<8x128xf32>
    %82 = arith.addf %79, %81 : vector<8x128xf32>
    %83 = arith.addf %64, %82 : vector<8x128xf32>
    %cst_24 = arith.constant dense<0.000000e+00> : vector<8x128xf32>
    %84 = tpu.matmul %82, %0, %cst_24 {dimension_numbers = #tpu.dot_dimension_numbers<[1], [0], [0], [1], [0, 0, 1, 1], [], []>} : vector<8x128xf32>, vector<128x128xf32>, vector<8x128xf32> -> vector<8x128xf32>
    %85 = vector.broadcast %2 : vector<1x128xf32> to vector<8x128xf32>
    %86 = arith.mulf %70, %85 : vector<8x128xf32>
    %87 = vector.broadcast %3 : vector<1x128xf32> to vector<8x128xf32>
    %88 = arith.mulf %84, %87 : vector<8x128xf32>
    %89 = arith.addf %86, %88 : vector<8x128xf32>
    %c4 = arith.constant 4 : index
    %c0_25 = arith.constant 0 : index
    %c0_26 = arith.constant 0 : index
    %90 = vector.load %arg0[%c4, %c0_25, %c0_26] : memref<12x8x128xf32, #tpu.memory_space<vmem>>, vector<1x8x128xf32>
    %91 = vector.shape_cast %90 : vector<1x8x128xf32> to vector<8x128xf32>
    %92 = arith.addf %91, %89 : vector<8x128xf32>
    %93 = vector.broadcast %6 : vector<1x128xf32> to vector<8x128xf32>
    %94 = arith.subf %92, %93 : vector<8x128xf32>
    %cst_27 = arith.constant 0.000000e+00 : f32
    %95 = vector.broadcast %cst_27 : f32 to vector<8x128xf32>
    %96 = arith.maximumf %94, %95 : vector<8x128xf32>
    %97 = vector.broadcast %4 : vector<1x128xf32> to vector<8x128xf32>
    %98 = arith.mulf %82, %97 : vector<8x128xf32>
    %99 = vector.broadcast %5 : vector<1x128xf32> to vector<8x128xf32>
    %100 = arith.mulf %96, %99 : vector<8x128xf32>
    %101 = arith.addf %98, %100 : vector<8x128xf32>
    %102 = arith.addf %83, %101 : vector<8x128xf32>
    %cst_28 = arith.constant 5.000000e-01 : f32
    %103 = vector.broadcast %cst_28 : f32 to vector<8x128xf32>
    %104 = arith.mulf %102, %103 : vector<8x128xf32>
    %c0_29 = arith.constant 0 : index
    %c0_30 = arith.constant 0 : index
    %c0_31 = arith.constant 0 : index
    %105 = vector.load %arg5[%c0_29, %c0_30, %c0_31] : memref<4x8x128xf32, #tpu.memory_space<vmem>>, vector<1x8x128xf32>
    %106 = vector.shape_cast %105 : vector<1x8x128xf32> to vector<8x128xf32>
    %107 = vector.shape_cast %104 : vector<8x128xf32> to vector<1x8x128xf32>
    tpu.vector_store %arg5[%c0_29, %c0_30, %c0_31], %107 {strides = array<i32>} : memref<4x8x128xf32, #tpu.memory_space<vmem>>, vector<1x8x128xf32>,
    %cst_32 = arith.constant 0.000000e+00 : f32
    %108 = vector.broadcast %cst_32 : f32 to vector<8x128xf32>
    %cst_33 = arith.constant dense<0.000000e+00> : vector<8x128xf32>
    %109 = tpu.matmul %101, %0, %cst_33 {dimension_numbers = #tpu.dot_dimension_numbers<[1], [0], [0], [1], [0, 0, 1, 1], [], []>} : vector<8x128xf32>, vector<128x128xf32>, vector<8x128xf32> -> vector<8x128xf32>
    %110 = vector.broadcast %2 : vector<1x128xf32> to vector<8x128xf32>
    %111 = arith.mulf %89, %110 : vector<8x128xf32>
    %112 = vector.broadcast %3 : vector<1x128xf32> to vector<8x128xf32>
    %113 = arith.mulf %109, %112 : vector<8x128xf32>
    %114 = arith.addf %111, %113 : vector<8x128xf32>
    %c5 = arith.constant 5 : index
    %c0_34 = arith.constant 0 : index
    %c0_35 = arith.constant 0 : index
    %115 = vector.load %arg0[%c5, %c0_34, %c0_35] : memref<12x8x128xf32, #tpu.memory_space<vmem>>, vector<1x8x128xf32>
    %116 = vector.shape_cast %115 : vector<1x8x128xf32> to vector<8x128xf32>
    %117 = arith.addf %116, %114 : vector<8x128xf32>
    %118 = vector.broadcast %6 : vector<1x128xf32> to vector<8x128xf32>
    %119 = arith.subf %117, %118 : vector<8x128xf32>
    %cst_36 = arith.constant 0.000000e+00 : f32
    %120 = vector.broadcast %cst_36 : f32 to vector<8x128xf32>
    %121 = arith.maximumf %119, %120 : vector<8x128xf32>
    %122 = vector.broadcast %4 : vector<1x128xf32> to vector<8x128xf32>
    %123 = arith.mulf %101, %122 : vector<8x128xf32>
    %124 = vector.broadcast %5 : vector<1x128xf32> to vector<8x128xf32>
    %125 = arith.mulf %121, %124 : vector<8x128xf32>
    %126 = arith.addf %123, %125 : vector<8x128xf32>
    %127 = arith.addf %108, %126 : vector<8x128xf32>
    %cst_37 = arith.constant dense<0.000000e+00> : vector<8x128xf32>
    %128 = tpu.matmul %126, %0, %cst_37 {dimension_numbers = #tpu.dot_dimension_numbers<[1], [0], [0], [1], [0, 0, 1, 1], [], []>} : vector<8x128xf32>, vector<128x128xf32>, vector<8x128xf32> -> vector<8x128xf32>
    %129 = vector.broadcast %2 : vector<1x128xf32> to vector<8x128xf32>
    %130 = arith.mulf %114, %129 : vector<8x128xf32>
    %131 = vector.broadcast %3 : vector<1x128xf32> to vector<8x128xf32>
    %132 = arith.mulf %128, %131 : vector<8x128xf32>
    %133 = arith.addf %130, %132 : vector<8x128xf32>
    %c6 = arith.constant 6 : index
    %c0_38 = arith.constant 0 : index
    %c0_39 = arith.constant 0 : index
    %134 = vector.load %arg0[%c6, %c0_38, %c0_39] : memref<12x8x128xf32, #tpu.memory_space<vmem>>, vector<1x8x128xf32>
    %135 = vector.shape_cast %134 : vector<1x8x128xf32> to vector<8x128xf32>
    %136 = arith.addf %135, %133 : vector<8x128xf32>
    %137 = vector.broadcast %6 : vector<1x128xf32> to vector<8x128xf32>
    %138 = arith.subf %136, %137 : vector<8x128xf32>
    %cst_40 = arith.constant 0.000000e+00 : f32
    %139 = vector.broadcast %cst_40 : f32 to vector<8x128xf32>
    %140 = arith.maximumf %138, %139 : vector<8x128xf32>
    %141 = vector.broadcast %4 : vector<1x128xf32> to vector<8x128xf32>
    %142 = arith.mulf %126, %141 : vector<8x128xf32>
    %143 = vector.broadcast %5 : vector<1x128xf32> to vector<8x128xf32>
    %144 = arith.mulf %140, %143 : vector<8x128xf32>
    %145 = arith.addf %142, %144 : vector<8x128xf32>
    %146 = arith.addf %127, %145 : vector<8x128xf32>
    %cst_41 = arith.constant 5.000000e-01 : f32
    %147 = vector.broadcast %cst_41 : f32 to vector<8x128xf32>
    %148 = arith.mulf %146, %147 : vector<8x128xf32>
    %c1_42 = arith.constant 1 : index
    %c0_43 = arith.constant 0 : index
    %c0_44 = arith.constant 0 : index
    %149 = vector.load %arg5[%c1_42, %c0_43, %c0_44] : memref<4x8x128xf32, #tpu.memory_space<vmem>>, vector<1x8x128xf32>
    %150 = vector.shape_cast %149 : vector<1x8x128xf32> to vector<8x128xf32>
    %151 = vector.shape_cast %148 : vector<8x128xf32> to vector<1x8x128xf32>
    tpu.vector_store %arg5[%c1_42, %c0_43, %c0_44], %151 {strides = array<i32>} : memref<4x8x128xf32, #tpu.memory_space<vmem>>, vector<1x8x128xf32>,
    %cst_45 = arith.constant 0.000000e+00 : f32
    %152 = vector.broadcast %cst_45 : f32 to vector<8x128xf32>
    %cst_46 = arith.constant dense<0.000000e+00> : vector<8x128xf32>
    %153 = tpu.matmul %145, %0, %cst_46 {dimension_numbers = #tpu.dot_dimension_numbers<[1], [0], [0], [1], [0, 0, 1, 1], [], []>} : vector<8x128xf32>, vector<128x128xf32>, vector<8x128xf32> -> vector<8x128xf32>
    %154 = vector.broadcast %2 : vector<1x128xf32> to vector<8x128xf32>
    %155 = arith.mulf %133, %154 : vector<8x128xf32>
    %156 = vector.broadcast %3 : vector<1x128xf32> to vector<8x128xf32>
    %157 = arith.mulf %153, %156 : vector<8x128xf32>
    %158 = arith.addf %155, %157 : vector<8x128xf32>
    %c7 = arith.constant 7 : index
    %c0_47 = arith.constant 0 : index
    %c0_48 = arith.constant 0 : index
    %159 = vector.load %arg0[%c7, %c0_47, %c0_48] : memref<12x8x128xf32, #tpu.memory_space<vmem>>, vector<1x8x128xf32>
    %160 = vector.shape_cast %159 : vector<1x8x128xf32> to vector<8x128xf32>
    %161 = arith.addf %160, %158 : vector<8x128xf32>
    %162 = vector.broadcast %6 : vector<1x128xf32> to vector<8x128xf32>
    %163 = arith.subf %161, %162 : vector<8x128xf32>
    %cst_49 = arith.constant 0.000000e+00 : f32
    %164 = vector.broadcast %cst_49 : f32 to vector<8x128xf32>
    %165 = arith.maximumf %163, %164 : vector<8x128xf32>
    %166 = vector.broadcast %4 : vector<1x128xf32> to vector<8x128xf32>
    %167 = arith.mulf %145, %166 : vector<8x128xf32>
    %168 = vector.broadcast %5 : vector<1x128xf32> to vector<8x128xf32>
    %169 = arith.mulf %165, %168 : vector<8x128xf32>
    %170 = arith.addf %167, %169 : vector<8x128xf32>
    %171 = arith.addf %152, %170 : vector<8x128xf32>
    %cst_50 = arith.constant dense<0.000000e+00> : vector<8x128xf32>
    %172 = tpu.matmul %170, %0, %cst_50 {dimension_numbers = #tpu.dot_dimension_numbers<[1], [0], [0], [1], [0, 0, 1, 1], [], []>} : vector<8x128xf32>, vector<128x128xf32>, vector<8x128xf32> -> vector<8x128xf32>
    %173 = vector.broadcast %2 : vector<1x128xf32> to vector<8x128xf32>
    %174 = arith.mulf %158, %173 : vector<8x128xf32>
    %175 = vector.broadcast %3 : vector<1x128xf32> to vector<8x128xf32>
    %176 = arith.mulf %172, %175 : vector<8x128xf32>
    %177 = arith.addf %174, %176 : vector<8x128xf32>
    %c8 = arith.constant 8 : index
    %c0_51 = arith.constant 0 : index
    %c0_52 = arith.constant 0 : index
    %178 = vector.load %arg0[%c8, %c0_51, %c0_52] : memref<12x8x128xf32, #tpu.memory_space<vmem>>, vector<1x8x128xf32>
    %179 = vector.shape_cast %178 : vector<1x8x128xf32> to vector<8x128xf32>
    %180 = arith.addf %179, %177 : vector<8x128xf32>
    %181 = vector.broadcast %6 : vector<1x128xf32> to vector<8x128xf32>
    %182 = arith.subf %180, %181 : vector<8x128xf32>
    %cst_53 = arith.constant 0.000000e+00 : f32
    %183 = vector.broadcast %cst_53 : f32 to vector<8x128xf32>
    %184 = arith.maximumf %182, %183 : vector<8x128xf32>
    %185 = vector.broadcast %4 : vector<1x128xf32> to vector<8x128xf32>
    %186 = arith.mulf %170, %185 : vector<8x128xf32>
    %187 = vector.broadcast %5 : vector<1x128xf32> to vector<8x128xf32>
    %188 = arith.mulf %184, %187 : vector<8x128xf32>
    %189 = arith.addf %186, %188 : vector<8x128xf32>
    %190 = arith.addf %171, %189 : vector<8x128xf32>
    %cst_54 = arith.constant 5.000000e-01 : f32
    %191 = vector.broadcast %cst_54 : f32 to vector<8x128xf32>
    %192 = arith.mulf %190, %191 : vector<8x128xf32>
    %c2_55 = arith.constant 2 : index
    %c0_56 = arith.constant 0 : index
    %c0_57 = arith.constant 0 : index
    %193 = vector.load %arg5[%c2_55, %c0_56, %c0_57] : memref<4x8x128xf32, #tpu.memory_space<vmem>>, vector<1x8x128xf32>
    %194 = vector.shape_cast %193 : vector<1x8x128xf32> to vector<8x128xf32>
    %195 = vector.shape_cast %192 : vector<8x128xf32> to vector<1x8x128xf32>
    tpu.vector_store %arg5[%c2_55, %c0_56, %c0_57], %195 {strides = array<i32>} : memref<4x8x128xf32, #tpu.memory_space<vmem>>, vector<1x8x128xf32>,
    %cst_58 = arith.constant 0.000000e+00 : f32
    %196 = vector.broadcast %cst_58 : f32 to vector<8x128xf32>
    %cst_59 = arith.constant dense<0.000000e+00> : vector<8x128xf32>
    %197 = tpu.matmul %189, %0, %cst_59 {dimension_numbers = #tpu.dot_dimension_numbers<[1], [0], [0], [1], [0, 0, 1, 1], [], []>} : vector<8x128xf32>, vector<128x128xf32>, vector<8x128xf32> -> vector<8x128xf32>
    %198 = vector.broadcast %2 : vector<1x128xf32> to vector<8x128xf32>
    %199 = arith.mulf %177, %198 : vector<8x128xf32>
    %200 = vector.broadcast %3 : vector<1x128xf32> to vector<8x128xf32>
    %201 = arith.mulf %197, %200 : vector<8x128xf32>
    %202 = arith.addf %199, %201 : vector<8x128xf32>
    %c9 = arith.constant 9 : index
    %c0_60 = arith.constant 0 : index
    %c0_61 = arith.constant 0 : index
    %203 = vector.load %arg0[%c9, %c0_60, %c0_61] : memref<12x8x128xf32, #tpu.memory_space<vmem>>, vector<1x8x128xf32>
    %204 = vector.shape_cast %203 : vector<1x8x128xf32> to vector<8x128xf32>
    %205 = arith.addf %204, %202 : vector<8x128xf32>
    %206 = vector.broadcast %6 : vector<1x128xf32> to vector<8x128xf32>
    %207 = arith.subf %205, %206 : vector<8x128xf32>
    %cst_62 = arith.constant 0.000000e+00 : f32
    %208 = vector.broadcast %cst_62 : f32 to vector<8x128xf32>
    %209 = arith.maximumf %207, %208 : vector<8x128xf32>
    %210 = vector.broadcast %4 : vector<1x128xf32> to vector<8x128xf32>
    %211 = arith.mulf %189, %210 : vector<8x128xf32>
    %212 = vector.broadcast %5 : vector<1x128xf32> to vector<8x128xf32>
    %213 = arith.mulf %209, %212 : vector<8x128xf32>
    %214 = arith.addf %211, %213 : vector<8x128xf32>
    %215 = arith.addf %196, %214 : vector<8x128xf32>
    %cst_63 = arith.constant dense<0.000000e+00> : vector<8x128xf32>
    %216 = tpu.matmul %214, %0, %cst_63 {dimension_numbers = #tpu.dot_dimension_numbers<[1], [0], [0], [1], [0, 0, 1, 1], [], []>} : vector<8x128xf32>, vector<128x128xf32>, vector<8x128xf32> -> vector<8x128xf32>
    %217 = vector.broadcast %2 : vector<1x128xf32> to vector<8x128xf32>
    %218 = arith.mulf %202, %217 : vector<8x128xf32>
    %219 = vector.broadcast %3 : vector<1x128xf32> to vector<8x128xf32>
    %220 = arith.mulf %216, %219 : vector<8x128xf32>
    %221 = arith.addf %218, %220 : vector<8x128xf32>
    %c10 = arith.constant 10 : index
    %c0_64 = arith.constant 0 : index
    %c0_65 = arith.constant 0 : index
    %222 = vector.load %arg0[%c10, %c0_64, %c0_65] : memref<12x8x128xf32, #tpu.memory_space<vmem>>, vector<1x8x128xf32>
    %223 = vector.shape_cast %222 : vector<1x8x128xf32> to vector<8x128xf32>
    %224 = arith.addf %223, %221 : vector<8x128xf32>
    %225 = vector.broadcast %6 : vector<1x128xf32> to vector<8x128xf32>
    %226 = arith.subf %224, %225 : vector<8x128xf32>
    %cst_66 = arith.constant 0.000000e+00 : f32
    %227 = vector.broadcast %cst_66 : f32 to vector<8x128xf32>
    %228 = arith.maximumf %226, %227 : vector<8x128xf32>
    %229 = vector.broadcast %4 : vector<1x128xf32> to vector<8x128xf32>
    %230 = arith.mulf %214, %229 : vector<8x128xf32>
    %231 = vector.broadcast %5 : vector<1x128xf32> to vector<8x128xf32>
    %232 = arith.mulf %228, %231 : vector<8x128xf32>
    %233 = arith.addf %230, %232 : vector<8x128xf32>
    %234 = arith.addf %215, %233 : vector<8x128xf32>
    %cst_67 = arith.constant 5.000000e-01 : f32
    %235 = vector.broadcast %cst_67 : f32 to vector<8x128xf32>
    %236 = arith.mulf %234, %235 : vector<8x128xf32>
    %c3_68 = arith.constant 3 : index
    %c0_69 = arith.constant 0 : index
    %c0_70 = arith.constant 0 : index
    %237 = vector.load %arg5[%c3_68, %c0_69, %c0_70] : memref<4x8x128xf32, #tpu.memory_space<vmem>>, vector<1x8x128xf32>
    %238 = vector.shape_cast %237 : vector<1x8x128xf32> to vector<8x128xf32>
    %239 = vector.shape_cast %236 : vector<8x128xf32> to vector<1x8x128xf32>
    tpu.vector_store %arg5[%c3_68, %c0_69, %c0_70], %239 {strides = array<i32>} : memref<4x8x128xf32, #tpu.memory_space<vmem>>, vector<1x8x128xf32>,
    return
  }
}

</mosaic_0001>

<llo_original>
// kernel: tpu_custom_call.1
$region0: #{tpu_custom_call.1}
  #allocation0 [shape = 'u32[]', space=smem, size = 0x4, offset = 0x4, fixed_abs, tag = 'smem constant byte address 0x4 - core index']
  #allocation1 [shape = 'u32[144,128]{1,0:T(1,128)}', space=vmem, size = 0x12000, scoped, tag = 'internal scratch']
  %s0 = inlined_call_operand.hbm [shape: f32[12,8,128], index: 0, kind: input, shape index: {}]
  %s1 = inlined_call_operand.hbm [shape: f32[128,128], index: 1, kind: input, shape index: {}]
  %s2 = inlined_call_operand.hbm [shape: f32[8,128], index: 2, kind: input, shape index: {}]
  %s3 = inlined_call_operand.hbm [shape: f32[8,128], index: 3, kind: input, shape index: {}]
  %s4 = inlined_call_operand.hbm [shape: f32[8,128], index: 4, kind: input, shape index: {}]
  %s5 = inlined_call_operand.hbm [shape: f32[4,8,128], index: 5, kind: output, shape index: {}]
  %s6 = sld [smem:[#allocation0]]
  $region50: #{tpu_custom_call.1} parent=0
    _
  %s8 = ssub.s32 1, %s6
  %s9 = scalar_select 0, %s8, %s6
  $region1: #{tpu_custom_call.1} parent=0
    #allocation2 [shape = 'u8[49152]{0}', space=vmem, size = 0xc000, scoped, tag = 'input window, operand 0, single buffered']
    #allocation3 [shape = 's32[1]{0}', space=sflag, size = 0x4, scoped, tag = 'scoped memory for tpu_custom_call.1']
    #allocation4 [shape = 's32[1]{0}', space=sflag, size = 0x4, scoped, tag = 'scoped memory for tpu_custom_call.1']
    #allocation5 [shape = 'u8[65536]{0}', space=vmem, size = 0x10000, scoped, tag = 'input window, operand 1, single buffered']
    #allocation6 [shape = 's32[1]{0}', space=sflag, size = 0x4, scoped, tag = 'scoped memory for tpu_custom_call.1']
    #allocation7 [shape = 'u8[4096]{0}', space=vmem, size = 0x1000, scoped, tag = 'input window, operand 2, single buffered']
    #allocation8 [shape = 'u8[4096]{0}', space=vmem, size = 0x1000, scoped, tag = 'input window, operand 3, single buffered']
    #allocation9 [shape = 's32[1]{0}', space=sflag, size = 0x4, scoped, tag = 'scoped memory for tpu_custom_call.1']
    #allocation10 [shape = 'u8[4096]{0}', space=vmem, size = 0x1000, scoped, tag = 'input window, operand 4, single buffered']
    #allocation11 [shape = 'u8[16384]{0}', space=vmem, size = 0x4000, scoped, tag = 'output window, operand 0, single buffered']
    %10 = vsyncpa [#allocation3], 0
    %11 = vsyncpa [#allocation6], 0
    %12 = vsyncpa [#allocation9], 0
    %13 = vsyncpa [#allocation4], 0
    // Predicated region
    $region2: #{tpu_custom_call.1} parent=1 // pred_check
      _
    $region3: #{tpu_custom_call.1} parent=1 // pred_check_branch
      %15 = sbr.rel (0) target = $region5
    $region4: #{tpu_custom_call.1} parent=1 // pred_region
      %s17 = ssub.s32 1536, 1536
      %18 = vsyncadd [#allocation3], %s17
      %s19 = sshll.u32 [#allocation2], 4
      %s20 = int_to_ptr.vmem [resolvable:$true] %s19
      %25 = dma.hbm_to_vmem [thread:$0]  %s0, 1536, %s20, [#allocation3], 128, 128, 8
    $region5: #{tpu_custom_call.1} parent=1 // pred_fallthru
      _
    // Predicated region
    $region6: #{tpu_custom_call.1} parent=1 // pred_check
      _
    $region7: #{tpu_custom_call.1} parent=1 // pred_check_branch
      %27 = sbr.rel (0) target = $region9
    $region8: #{tpu_custom_call.1} parent=1 // pred_region
      %s29 = ssub.s32 2048, 2048
      %30 = vsyncadd [#allocation6], %s29
      %s31 = sshll.u32 [#allocation5], 4
      %s32 = int_to_ptr.vmem [resolvable:$true] %s31
      %37 = dma.hbm_to_vmem [thread:$0]  %s1, 2048, %s32, [#allocation6], 128, 128, 8
    $region9: #{tpu_custom_call.1} parent=1 // pred_fallthru
      _
    // Predicated region
    $region10: #{tpu_custom_call.1} parent=1 // pred_check
      _
    $region11: #{tpu_custom_call.1} parent=1 // pred_check_branch
      %39 = sbr.rel (0) target = $region13
    $region12: #{tpu_custom_call.1} parent=1 // pred_region
      %s41 = ssub.s32 128, 128
      %42 = vsyncadd [#allocation6], %s41
      %s44 = sshll.u32 [#allocation7], 4
      %s45 = int_to_ptr.vmem [resolvable:$true] %s44
      %47 = dma.hbm_to_vmem [thread:$0]  %s2, 128, %s45, [#allocation6]
    $region13: #{tpu_custom_call.1} parent=1 // pred_fallthru
      _
    // Predicated region
    $region14: #{tpu_custom_call.1} parent=1 // pred_check
      _
    $region15: #{tpu_custom_call.1} parent=1 // pred_check_branch
      %49 = sbr.rel (0) target = $region17
    $region16: #{tpu_custom_call.1} parent=1 // pred_region
      %s51 = ssub.s32 128, 128
      %52 = vsyncadd [#allocation9], %s51
      %s54 = sshll.u32 [#allocation8], 4
      %s55 = int_to_ptr.vmem [resolvable:$true] %s54
      %57 = dma.hbm_to_vmem [thread:$0]  %s3, 128, %s55, [#allocation9]
    $region17: #{tpu_custom_call.1} parent=1 // pred_fallthru
      _
    // Predicated region
    $region18: #{tpu_custom_call.1} parent=1 // pred_check
      _
    $region19: #{tpu_custom_call.1} parent=1 // pred_check_branch
      %59 = sbr.rel (0) target = $region21
    $region20: #{tpu_custom_call.1} parent=1 // pred_region
      %s61 = ssub.s32 128, 128
      %62 = vsyncadd [#allocation9], %s61
      %s64 = sshll.u32 [#allocation10], 4
      %s65 = int_to_ptr.vmem [resolvable:$true] %s64
      %67 = dma.hbm_to_vmem [thread:$0]  %s4, 128, %s65, [#allocation9]
    $region21: #{tpu_custom_call.1} parent=1 // pred_fallthru
      _
    // Predicated region
    $region22: #{tpu_custom_call.1} parent=1 // pred_check
      _
    $region23: #{tpu_custom_call.1} parent=1 // pred_check_branch
      %69 = sbr.rel (0) target = $region25
    $region24: #{tpu_custom_call.1} parent=1 // pred_region
      %70 = dma.done [#allocation3], 1536
    $region25: #{tpu_custom_call.1} parent=1 // pred_fallthru
      _
    // Predicated region
    $region26: #{tpu_custom_call.1} parent=1 // pred_check
      _
    $region27: #{tpu_custom_call.1} parent=1 // pred_check_branch
      %72 = sbr.rel (0) target = $region29
    $region28: #{tpu_custom_call.1} parent=1 // pred_region
      %73 = dma.done [#allocation6], 2048
    $region29: #{tpu_custom_call.1} parent=1 // pred_fallthru
      _
    // Predicated region
    $region30: #{tpu_custom_call.1} parent=1 // pred_check
      _
    $region31: #{tpu_custom_call.1} parent=1 // pred_check_branch
      %75 = sbr.rel (0) target = $region33
    $region32: #{tpu_custom_call.1} parent=1 // pred_region
      %76 = dma.done [#allocation6], 128
    $region33: #{tpu_custom_call.1} parent=1 // pred_fallthru
      _
    // Predicated region
    $region34: #{tpu_custom_call.1} parent=1 // pred_check
      _
    $region35: #{tpu_custom_call.1} parent=1 // pred_check_branch
      %78 = sbr.rel (0) target = $region37
    $region36: #{tpu_custom_call.1} parent=1 // pred_region
      %79 = dma.done [#allocation9], 128
    $region37: #{tpu_custom_call.1} parent=1 // pred_fallthru
      _
    // Predicated region
    $region38: #{tpu_custom_call.1} parent=1 // pred_check
      _
    $region39: #{tpu_custom_call.1} parent=1 // pred_check_branch
      %81 = sbr.rel (0) target = $region41
    $region40: #{tpu_custom_call.1} parent=1 // pred_region
      %82 = dma.done [#allocation9], 128
    $region41: #{tpu_custom_call.1} parent=1 // pred_fallthru
      _
    %v83 = vld [vmem:[#allocation5] sm:$0xff]
    %v84 = vld [vmem:[#allocation5 + $0x8] sm:$0xff]
    %v85 = vld [vmem:[#allocation5 + $0x10] sm:$0xff]
    %v86 = vld [vmem:[#allocation5 + $0x18] sm:$0xff]
    %v87 = vld [vmem:[#allocation5 + $0x20] sm:$0xff]
    %v88 = vld [vmem:[#allocation5 + $0x28] sm:$0xff]
    %v89 = vld [vmem:[#allocation5 + $0x30] sm:$0xff]
    %v90 = vld [vmem:[#allocation5 + $0x38] sm:$0xff]
    %v91 = vld [vmem:[#allocation5 + $0x40] sm:$0xff]
    %v92 = vld [vmem:[#allocation5 + $0x48] sm:$0xff]
    %v93 = vld [vmem:[#allocation5 + $0x50] sm:$0xff]
    %v94 = vld [vmem:[#allocation5 + $0x58] sm:$0xff]
    %v95 = vld [vmem:[#allocation5 + $0x60] sm:$0xff]
    %v96 = vld [vmem:[#allocation5 + $0x68] sm:$0xff]
    %v97 = vld [vmem:[#allocation5 + $0x70] sm:$0xff]
    %v98 = vld [vmem:[#allocation5 + $0x78] sm:$0xff]
    %v99 = vld [vmem:[#allocation10] sm:$0xff]
    %v100 = vld [vmem:[#allocation7] sm:$0xff]
    %v101 = vld [vmem:[#allocation8] sm:$0xff]
    %102 = vmatprep.subr.mxu0 0.0
    %103 = vmatpush1.msra.mxu0 %v98
    %104 = vmatprep.subr.mxu0 0.0
    %105 = vmatpush1.msra.mxu0 %v97
    %106 = vmatprep.subr.mxu0 0.0
    %107 = vmatpush1.msra.mxu0 %v96
    %108 = vmatprep.subr.mxu0 0.0
    %109 = vmatpush1.msra.mxu0 %v95
    %110 = vmatprep.subr.mxu0 0.0
    %111 = vmatpush1.msra.mxu0 %v94
    %112 = vmatprep.subr.mxu0 0.0
    %113 = vmatpush1.msra.mxu0 %v93
    %114 = vmatprep.subr.mxu0 0.0
    %115 = vmatpush1.msra.mxu0 %v92
    %116 = vmatprep.subr.mxu0 0.0
    %117 = vmatpush1.msra.mxu0 %v91
    %118 = vmatprep.subr.mxu0 0.0
    %119 = vmatpush1.msra.mxu0 %v90
    %120 = vmatprep.subr.mxu0 0.0
    %121 = vmatpush1.msra.mxu0 %v89
    %122 = vmatprep.subr.mxu0 0.0
    %123 = vmatpush1.msra.mxu0 %v88
    %124 = vmatprep.subr.mxu0 0.0
    %125 = vmatpush1.msra.mxu0 %v87
    %126 = vmatprep.subr.mxu0 0.0
    %127 = vmatpush1.msra.mxu0 %v86
    %128 = vmatprep.subr.mxu0 0.0
    %129 = vmatpush1.msra.mxu0 %v85
    %130 = vmatprep.subr.mxu0 0.0
    %131 = vmatpush1.msra.mxu0 %v84
    %132 = vmatprep.subr.mxu0 0.0
    %133 = vmatpush1.msra.mxu0 %v83
    %134 = vmatprep.subr.mxu0 0.0
    %135 = vmatpush2.msra.mxu0 0.0
    %136 = vmatprep.subr.mxu0 0.0
    %137 = vmatpush2.msra.mxu0 0.0
    %138 = vmatprep.subr.mxu0 0.0
    %139 = vmatpush2.msra.mxu0 0.0
    %140 = vmatprep.subr.mxu0 0.0
    %141 = vmatpush2.msra.mxu0 0.0
    %142 = vmatprep.subr.mxu0 0.0
    %143 = vmatpush2.msra.mxu0 0.0
    %144 = vmatprep.subr.mxu0 0.0
    %145 = vmatpush2.msra.mxu0 0.0
    %146 = vmatprep.subr.mxu0 0.0
    %147 = vmatpush2.msra.mxu0 0.0
    %148 = vmatprep.subr.mxu0 0.0
    %149 = vmatpush2.msra.mxu0 0.0
    %150 = vmatprep.subr.mxu0 0.0
    %151 = vmatpush2.msra.mxu0 0.0
    %152 = vmatprep.subr.mxu0 0.0
    %153 = vmatpush2.msra.mxu0 0.0
    %154 = vmatprep.subr.mxu0 0.0
    %155 = vmatpush2.msra.mxu0 0.0
    %156 = vmatprep.subr.mxu0 0.0
    %157 = vmatpush2.msra.mxu0 0.0
    %158 = vmatprep.subr.mxu0 0.0
    %159 = vmatpush2.msra.mxu0 0.0
    %160 = vmatprep.subr.mxu0 0.0
    %161 = vmatpush2.msra.mxu0 0.0
    %162 = vmatprep.subr.mxu0 0.0
    %163 = vmatpush2.msra.mxu0 0.0
    %164 = vmatprep.subr.mxu0 0.0
    %165 = vmatpush2.msra.mxu0 0.0
    %166 = vmatprep.mubr.f32.mxu0 0.0
    %167 = vmatmul.mubr.f32.gmra.mxu0 %v100
    %v168 = vpop.f32.mrf.mxu0
    %v169 = vadd.f32 0.0, %v168
    %v170 = vpop.f32.mrf.mxu0
    %171 = vdwg.mxu0
    %v172 = vlaneseq
    %v173 = vshrl.u32 %v172, 7
    %v174 = vsub.s32 0, %v173
    %v175 = vrot.slane %v99, %v174
    %v176 = vmul.f32 %v101, %v175
    %v177 = vlaneseq
    %v178 = vshrl.u32 %v177, 7
    %v179 = vsub.s32 1, %v178
    %v180 = vrot.slane %v99, %v179
    %v181 = vmul.f32 %v169, %v180
    %v182 = vadd.f32 %v176, %v181
    %v183 = vld [vmem:[#allocation2] sm:$0xff]
    %v184 = vadd.f32 %v183, %v182
    %v185 = vlaneseq
    %v186 = vshrl.u32 %v185, 7
    %v187 = vsub.s32 4, %v186
    %v188 = vrot.slane %v99, %v187
    %v189 = vsub.f32 %v184, %v188
    %v190 = vmax.f32 %v189, 0.0
    %v191 = vlaneseq
    %v192 = vshrl.u32 %v191, 7
    %v193 = vsub.s32 2, %v192
    %v194 = vrot.slane %v99, %v193
    %v195 = vmul.f32 %v100, %v194
    %v196 = vlaneseq
    %v197 = vshrl.u32 %v196, 7
    %v198 = vsub.s32 3, %v197
    %v199 = vrot.slane %v99, %v198
    %v200 = vmul.f32 %v190, %v199
    %v201 = vadd.f32 %v195, %v200
    %202 = vmatprep.subr.mxu0 0.0
    %203 = vmatpush1.msra.mxu0 %v98
    %204 = vmatprep.subr.mxu0 0.0
    %205 = vmatpush1.msra.mxu0 %v97
    %206 = vmatprep.subr.mxu0 0.0
    %207 = vmatpush1.msra.mxu0 %v96
    %208 = vmatprep.subr.mxu0 0.0
    %209 = vmatpush1.msra.mxu0 %v95
    %210 = vmatprep.subr.mxu0 0.0
    %211 = vmatpush1.msra.mxu0 %v94
    %212 = vmatprep.subr.mxu0 0.0
    %213 = vmatpush1.msra.mxu0 %v93
    %214 = vmatprep.subr.mxu0 0.0
    %215 = vmatpush1.msra.mxu0 %v92
    %216 = vmatprep.subr.mxu0 0.0
    %217 = vmatpush1.msra.mxu0 %v91
    %218 = vmatprep.subr.mxu0 0.0
    %219 = vmatpush1.msra.mxu0 %v90
    %220 = vmatprep.subr.mxu0 0.0
    %221 = vmatpush1.msra.mxu0 %v89
    %222 = vmatprep.subr.mxu0 0.0
    %223 = vmatpush1.msra.mxu0 %v88
    %224 = vmatprep.subr.mxu0 0.0
    %225 = vmatpush1.msra.mxu0 %v87
    %226 = vmatprep.subr.mxu0 0.0
    %227 = vmatpush1.msra.mxu0 %v86
    %228 = vmatprep.subr.mxu0 0.0
    %229 = vmatpush1.msra.mxu0 %v85
    %230 = vmatprep.subr.mxu0 0.0
    %231 = vmatpush1.msra.mxu0 %v84
    %232 = vmatprep.subr.mxu0 0.0
    %233 = vmatpush1.msra.mxu0 %v83
    %234 = vmatprep.subr.mxu0 0.0
    %235 = vmatpush2.msra.mxu0 0.0
    %236 = vmatprep.subr.mxu0 0.0
    %237 = vmatpush2.msra.mxu0 0.0
    %238 = vmatprep.subr.mxu0 0.0
    %239 = vmatpush2.msra.mxu0 0.0
    %240 = vmatprep.subr.mxu0 0.0
    %241 = vmatpush2.msra.mxu0 0.0
    %242 = vmatprep.subr.mxu0 0.0
    %243 = vmatpush2.msra.mxu0 0.0
    %244 = vmatprep.subr.mxu0 0.0
    %245 = vmatpush2.msra.mxu0 0.0
    %246 = vmatprep.subr.mxu0 0.0
    %247 = vmatpush2.msra.mxu0 0.0
    %248 = vmatprep.subr.mxu0 0.0
    %249 = vmatpush2.msra.mxu0 0.0
    %250 = vmatprep.subr.mxu0 0.0
    %251 = vmatpush2.msra.mxu0 0.0
    %252 = vmatprep.subr.mxu0 0.0
    %253 = vmatpush2.msra.mxu0 0.0
    %254 = vmatprep.subr.mxu0 0.0
    %255 = vmatpush2.msra.mxu0 0.0
    %256 = vmatprep.subr.mxu0 0.0
    %257 = vmatpush2.msra.mxu0 0.0
    %258 = vmatprep.subr.mxu0 0.0
    %259 = vmatpush2.msra.mxu0 0.0
    %260 = vmatprep.subr.mxu0 0.0
    %261 = vmatpush2.msra.mxu0 0.0
    %262 = vmatprep.subr.mxu0 0.0
    %263 = vmatpush2.msra.mxu0 0.0
    %264 = vmatprep.subr.mxu0 0.0
    %265 = vmatpush2.msra.mxu0 0.0
    %266 = vmatprep.mubr.f32.mxu0 0.0
    %267 = vmatmul.mubr.f32.gmra.mxu0 %v201
    %v268 = vpop.f32.mrf.mxu0
    %v269 = vadd.f32 0.0, %v268
    %v270 = vpop.f32.mrf.mxu0
    %271 = vdwg.mxu0
    %v272 = vmul.f32 %v182, %v175
    %v273 = vmul.f32 %v269, %v180
    %v274 = vadd.f32 %v272, %v273
    %s275 = scalar_lea.vmem [#allocation2], 8
    %v276 = vld [vmem:[%s275] sm:$0xff]
    %v277 = vadd.f32 %v276, %v274
    %v278 = vsub.f32 %v277, %v188
    %v279 = vmax.f32 %v278, 0.0
    %v280 = vmul.f32 %v201, %v194
    %v281 = vmul.f32 %v279, %v199
    %v282 = vadd.f32 %v280, %v281
    %283 = vmatprep.subr.mxu0 0.0
    %284 = vmatpush1.msra.mxu0 %v98
    %285 = vmatprep.subr.mxu0 0.0
    %286 = vmatpush1.msra.mxu0 %v97
    %287 = vmatprep.subr.mxu0 0.0
    %288 = vmatpush1.msra.mxu0 %v96
    %289 = vmatprep.subr.mxu0 0.0
    %290 = vmatpush1.msra.mxu0 %v95
    %291 = vmatprep.subr.mxu0 0.0
    %292 = vmatpush1.msra.mxu0 %v94
    %293 = vmatprep.subr.mxu0 0.0
    %294 = vmatpush1.msra.mxu0 %v93
    %295 = vmatprep.subr.mxu0 0.0
    %296 = vmatpush1.msra.mxu0 %v92
    %297 = vmatprep.subr.mxu0 0.0
    %298 = vmatpush1.msra.mxu0 %v91
    %299 = vmatprep.subr.mxu0 0.0
    %300 = vmatpush1.msra.mxu0 %v90
    %301 = vmatprep.subr.mxu0 0.0
    %302 = vmatpush1.msra.mxu0 %v89
    %303 = vmatprep.subr.mxu0 0.0
    %304 = vmatpush1.msra.mxu0 %v88
    %305 = vmatprep.subr.mxu0 0.0
    %306 = vmatpush1.msra.mxu0 %v87
    %307 = vmatprep.subr.mxu0 0.0
    %308 = vmatpush1.msra.mxu0 %v86
    %309 = vmatprep.subr.mxu0 0.0
    %310 = vmatpush1.msra.mxu0 %v85
    %311 = vmatprep.subr.mxu0 0.0
    %312 = vmatpush1.msra.mxu0 %v84
    %313 = vmatprep.subr.mxu0 0.0
    %314 = vmatpush1.msra.mxu0 %v83
    %315 = vmatprep.subr.mxu0 0.0
    %316 = vmatpush2.msra.mxu0 0.0
    %317 = vmatprep.subr.mxu0 0.0
    %318 = vmatpush2.msra.mxu0 0.0
    %319 = vmatprep.subr.mxu0 0.0
    %320 = vmatpush2.msra.mxu0 0.0
    %321 = vmatprep.subr.mxu0 0.0
    %322 = vmatpush2.msra.mxu0 0.0
    %323 = vmatprep.subr.mxu0 0.0
    %324 = vmatpush2.msra.mxu0 0.0
    %325 = vmatprep.subr.mxu0 0.0
    %326 = vmatpush2.msra.mxu0 0.0
    %327 = vmatprep.subr.mxu0 0.0
    %328 = vmatpush2.msra.mxu0 0.0
    %329 = vmatprep.subr.mxu0 0.0
    %330 = vmatpush2.msra.mxu0 0.0
    %331 = vmatprep.subr.mxu0 0.0
    %332 = vmatpush2.msra.mxu0 0.0
    %333 = vmatprep.subr.mxu0 0.0
    %334 = vmatpush2.msra.mxu0 0.0
    %335 = vmatprep.subr.mxu0 0.0
    %336 = vmatpush2.msra.mxu0 0.0
    %337 = vmatprep.subr.mxu0 0.0
    %338 = vmatpush2.msra.mxu0 0.0
    %339 = vmatprep.subr.mxu0 0.0
    %340 = vmatpush2.msra.mxu0 0.0
    %341 = vmatprep.subr.mxu0 0.0
    %342 = vmatpush2.msra.mxu0 0.0
    %343 = vmatprep.subr.mxu0 0.0
    %344 = vmatpush2.msra.mxu0 0.0
    %345 = vmatprep.subr.mxu0 0.0
    %346 = vmatpush2.msra.mxu0 0.0
    %347 = vmatprep.mubr.f32.mxu0 0.0
    %348 = vmatmul.mubr.f32.gmra.mxu0 %v282
    %v349 = vpop.f32.mrf.mxu0
    %v350 = vadd.f32 0.0, %v349
    %v351 = vpop.f32.mrf.mxu0
    %352 = vdwg.mxu0
    %v353 = vmul.f32 %v274, %v175
    %v354 = vmul.f32 %v350, %v180
    %v355 = vadd.f32 %v353, %v354
    %s356 = scalar_lea.vmem [#allocation2], 16
    %v357 = vld [vmem:[%s356] sm:$0xff]
    %v358 = vadd.f32 %v357, %v355
    %v359 = vsub.f32 %v358, %v188
    %v360 = vmax.f32 %v359, 0.0
    %v361 = vmul.f32 %v282, %v194
    %v362 = vmul.f32 %v360, %v199
    %v363 = vadd.f32 %v361, %v362
    %v364 = vadd.f32 %v363, 0.0
    %365 = vmatprep.subr.mxu0 0.0
    %366 = vmatpush1.msra.mxu0 %v98
    %367 = vmatprep.subr.mxu0 0.0
    %368 = vmatpush1.msra.mxu0 %v97
    %369 = vmatprep.subr.mxu0 0.0
    %370 = vmatpush1.msra.mxu0 %v96
    %371 = vmatprep.subr.mxu0 0.0
    %372 = vmatpush1.msra.mxu0 %v95
    %373 = vmatprep.subr.mxu0 0.0
    %374 = vmatpush1.msra.mxu0 %v94
    %375 = vmatprep.subr.mxu0 0.0
    %376 = vmatpush1.msra.mxu0 %v93
    %377 = vmatprep.subr.mxu0 0.0
    %378 = vmatpush1.msra.mxu0 %v92
    %379 = vmatprep.subr.mxu0 0.0
    %380 = vmatpush1.msra.mxu0 %v91
    %381 = vmatprep.subr.mxu0 0.0
    %382 = vmatpush1.msra.mxu0 %v90
    %383 = vmatprep.subr.mxu0 0.0
    %384 = vmatpush1.msra.mxu0 %v89
    %385 = vmatprep.subr.mxu0 0.0
    %386 = vmatpush1.msra.mxu0 %v88
    %387 = vmatprep.subr.mxu0 0.0
    %388 = vmatpush1.msra.mxu0 %v87
    %389 = vmatprep.subr.mxu0 0.0
    %390 = vmatpush1.msra.mxu0 %v86
    %391 = vmatprep.subr.mxu0 0.0
    %392 = vmatpush1.msra.mxu0 %v85
    %393 = vmatprep.subr.mxu0 0.0
    %394 = vmatpush1.msra.mxu0 %v84
    %395 = vmatprep.subr.mxu0 0.0
    %396 = vmatpush1.msra.mxu0 %v83
    %397 = vmatprep.subr.mxu0 0.0
    %398 = vmatpush2.msra.mxu0 0.0
    %399 = vmatprep.subr.mxu0 0.0
    %400 = vmatpush2.msra.mxu0 0.0
    %401 = vmatprep.subr.mxu0 0.0
    %402 = vmatpush2.msra.mxu0 0.0
    %403 = vmatprep.subr.mxu0 0.0
    %404 = vmatpush2.msra.mxu0 0.0
    %405 = vmatprep.subr.mxu0 0.0
    %406 = vmatpush2.msra.mxu0 0.0
    %407 = vmatprep.subr.mxu0 0.0
    %408 = vmatpush2.msra.mxu0 0.0
    %409 = vmatprep.subr.mxu0 0.0
    %410 = vmatpush2.msra.mxu0 0.0
    %411 = vmatprep.subr.mxu0 0.0
    %412 = vmatpush2.msra.mxu0 0.0
    %413 = vmatprep.subr.mxu0 0.0
    %414 = vmatpush2.msra.mxu0 0.0
    %415 = vmatprep.subr.mxu0 0.0
    %416 = vmatpush2.msra.mxu0 0.0
    %417 = vmatprep.subr.mxu0 0.0
    %418 = vmatpush2.msra.mxu0 0.0
    %419 = vmatprep.subr.mxu0 0.0
    %420 = vmatpush2.msra.mxu0 0.0
    %421 = vmatprep.subr.mxu0 0.0
    %422 = vmatpush2.msra.mxu0 0.0
    %423 = vmatprep.subr.mxu0 0.0
    %424 = vmatpush2.msra.mxu0 0.0
    %425 = vmatprep.subr.mxu0 0.0
    %426 = vmatpush2.msra.mxu0 0.0
    %427 = vmatprep.subr.mxu0 0.0
    %428 = vmatpush2.msra.mxu0 0.0
    %429 = vmatprep.mubr.f32.mxu0 0.0
    %430 = vmatmul.mubr.f32.gmra.mxu0 %v363
    %v431 = vpop.f32.mrf.mxu0
    %v432 = vadd.f32 0.0, %v431
    %v433 = vpop.f32.mrf.mxu0
    %434 = vdwg.mxu0
    %v435 = vmul.f32 %v355, %v175
    %v436 = vmul.f32 %v432, %v180
    %v437 = vadd.f32 %v435, %v436
    %s438 = scalar_lea.vmem [#allocation2], 24
    %v439 = vld [vmem:[%s438] sm:$0xff]
    %v440 = vadd.f32 %v439, %v437
    %v441 = vsub.f32 %v440, %v188
    %v442 = vmax.f32 %v441, 0.0
    %v443 = vmul.f32 %v363, %v194
    %v444 = vmul.f32 %v442, %v199
    %v445 = vadd.f32 %v443, %v444
    %v446 = vadd.f32 %v364, %v445
    %447 = vmatprep.subr.mxu0 0.0
    %448 = vmatpush1.msra.mxu0 %v98
    %449 = vmatprep.subr.mxu0 0.0
    %450 = vmatpush1.msra.mxu0 %v97
    %451 = vmatprep.subr.mxu0 0.0
    %452 = vmatpush1.msra.mxu0 %v96
    %453 = vmatprep.subr.mxu0 0.0
    %454 = vmatpush1.msra.mxu0 %v95
    %455 = vmatprep.subr.mxu0 0.0
    %456 = vmatpush1.msra.mxu0 %v94
    %457 = vmatprep.subr.mxu0 0.0
    %458 = vmatpush1.msra.mxu0 %v93
    %459 = vmatprep.subr.mxu0 0.0
    %460 = vmatpush1.msra.mxu0 %v92
    %461 = vmatprep.subr.mxu0 0.0
    %462 = vmatpush1.msra.mxu0 %v91
    %463 = vmatprep.subr.mxu0 0.0
    %464 = vmatpush1.msra.mxu0 %v90
    %465 = vmatprep.subr.mxu0 0.0
    %466 = vmatpush1.msra.mxu0 %v89
    %467 = vmatprep.subr.mxu0 0.0
    %468 = vmatpush1.msra.mxu0 %v88
    %469 = vmatprep.subr.mxu0 0.0
    %470 = vmatpush1.msra.mxu0 %v87
    %471 = vmatprep.subr.mxu0 0.0
    %472 = vmatpush1.msra.mxu0 %v86
    %473 = vmatprep.subr.mxu0 0.0
    %474 = vmatpush1.msra.mxu0 %v85
    %475 = vmatprep.subr.mxu0 0.0
    %476 = vmatpush1.msra.mxu0 %v84
    %477 = vmatprep.subr.mxu0 0.0
    %478 = vmatpush1.msra.mxu0 %v83
    %479 = vmatprep.subr.mxu0 0.0
    %480 = vmatpush2.msra.mxu0 0.0
    %481 = vmatprep.subr.mxu0 0.0
    %482 = vmatpush2.msra.mxu0 0.0
    %483 = vmatprep.subr.mxu0 0.0
    %484 = vmatpush2.msra.mxu0 0.0
    %485 = vmatprep.subr.mxu0 0.0
    %486 = vmatpush2.msra.mxu0 0.0
    %487 = vmatprep.subr.mxu0 0.0
    %488 = vmatpush2.msra.mxu0 0.0
    %489 = vmatprep.subr.mxu0 0.0
    %490 = vmatpush2.msra.mxu0 0.0
    %491 = vmatprep.subr.mxu0 0.0
    %492 = vmatpush2.msra.mxu0 0.0
    %493 = vmatprep.subr.mxu0 0.0
    %494 = vmatpush2.msra.mxu0 0.0
    %495 = vmatprep.subr.mxu0 0.0
    %496 = vmatpush2.msra.mxu0 0.0
    %497 = vmatprep.subr.mxu0 0.0
    %498 = vmatpush2.msra.mxu0 0.0
    %499 = vmatprep.subr.mxu0 0.0
    %500 = vmatpush2.msra.mxu0 0.0
    %501 = vmatprep.subr.mxu0 0.0
    %502 = vmatpush2.msra.mxu0 0.0
    %503 = vmatprep.subr.mxu0 0.0
    %504 = vmatpush2.msra.mxu0 0.0
    %505 = vmatprep.subr.mxu0 0.0
    %506 = vmatpush2.msra.mxu0 0.0
    %507 = vmatprep.subr.mxu0 0.0
    %508 = vmatpush2.msra.mxu0 0.0
    %509 = vmatprep.subr.mxu0 0.0
    %510 = vmatpush2.msra.mxu0 0.0
    %511 = vmatprep.mubr.f32.mxu0 0.0
    %512 = vmatmul.mubr.f32.gmra.mxu0 %v445
    %v513 = vpop.f32.mrf.mxu0
    %v514 = vadd.f32 0.0, %v513
    %v515 = vpop.f32.mrf.mxu0
    %516 = vdwg.mxu0
    %v517 = vmul.f32 %v437, %v175
    %v518 = vmul.f32 %v514, %v180
    %v519 = vadd.f32 %v517, %v518
    %s520 = scalar_lea.vmem [#allocation2], 32
    %v521 = vld [vmem:[%s520] sm:$0xff]
    %v522 = vadd.f32 %v521, %v519
    %v523 = vsub.f32 %v522, %v188
    %v524 = vmax.f32 %v523, 0.0
    %v525 = vmul.f32 %v445, %v194
    %v526 = vmul.f32 %v524, %v199
    %v527 = vadd.f32 %v525, %v526
    %v528 = vadd.f32 %v446, %v527
    %v529 = vmul.f32 %v528, 0.5
    %530 = vst [vmem:[#allocation11] sm:$0xff] %v529
    %531 = vmatprep.subr.mxu0 0.0
    %532 = vmatpush1.msra.mxu0 %v98
    %533 = vmatprep.subr.mxu0 0.0
    %534 = vmatpush1.msra.mxu0 %v97
    %535 = vmatprep.subr.mxu0 0.0
    %536 = vmatpush1.msra.mxu0 %v96
    %537 = vmatprep.subr.mxu0 0.0
    %538 = vmatpush1.msra.mxu0 %v95
    %539 = vmatprep.subr.mxu0 0.0
    %540 = vmatpush1.msra.mxu0 %v94
    %541 = vmatprep.subr.mxu0 0.0
    %542 = vmatpush1.msra.mxu0 %v93
    %543 = vmatprep.subr.mxu0 0.0
    %544 = vmatpush1.msra.mxu0 %v92
    %545 = vmatprep.subr.mxu0 0.0
    %546 = vmatpush1.msra.mxu0 %v91
    %547 = vmatprep.subr.mxu0 0.0
    %548 = vmatpush1.msra.mxu0 %v90
    %549 = vmatprep.subr.mxu0 0.0
    %550 = vmatpush1.msra.mxu0 %v89
    %551 = vmatprep.subr.mxu0 0.0
    %552 = vmatpush1.msra.mxu0 %v88
    %553 = vmatprep.subr.mxu0 0.0
    %554 = vmatpush1.msra.mxu0 %v87
    %555 = vmatprep.subr.mxu0 0.0
    %556 = vmatpush1.msra.mxu0 %v86
    %557 = vmatprep.subr.mxu0 0.0
    %558 = vmatpush1.msra.mxu0 %v85
    %559 = vmatprep.subr.mxu0 0.0
    %560 = vmatpush1.msra.mxu0 %v84
    %561 = vmatprep.subr.mxu0 0.0
    %562 = vmatpush1.msra.mxu0 %v83
    %563 = vmatprep.subr.mxu0 0.0
    %564 = vmatpush2.msra.mxu0 0.0
    %565 = vmatprep.subr.mxu0 0.0
    %566 = vmatpush2.msra.mxu0 0.0
    %567 = vmatprep.subr.mxu0 0.0
    %568 = vmatpush2.msra.mxu0 0.0
    %569 = vmatprep.subr.mxu0 0.0
    %570 = vmatpush2.msra.mxu0 0.0
    %571 = vmatprep.subr.mxu0 0.0
    %572 = vmatpush2.msra.mxu0 0.0
    %573 = vmatprep.subr.mxu0 0.0
    %574 = vmatpush2.msra.mxu0 0.0
    %575 = vmatprep.subr.mxu0 0.0
    %576 = vmatpush2.msra.mxu0 0.0
    %577 = vmatprep.subr.mxu0 0.0
    %578 = vmatpush2.msra.mxu0 0.0
    %579 = vmatprep.subr.mxu0 0.0
    %580 = vmatpush2.msra.mxu0 0.0
    %581 = vmatprep.subr.mxu0 0.0
    %582 = vmatpush2.msra.mxu0 0.0
    %583 = vmatprep.subr.mxu0 0.0
    %584 = vmatpush2.msra.mxu0 0.0
    %585 = vmatprep.subr.mxu0 0.0
    %586 = vmatpush2.msra.mxu0 0.0
    %587 = vmatprep.subr.mxu0 0.0
    %588 = vmatpush2.msra.mxu0 0.0
    %589 = vmatprep.subr.mxu0 0.0
    %590 = vmatpush2.msra.mxu0 0.0
    %591 = vmatprep.subr.mxu0 0.0
    %592 = vmatpush2.msra.mxu0 0.0
    %593 = vmatprep.subr.mxu0 0.0
    %594 = vmatpush2.msra.mxu0 0.0
    %595 = vmatprep.mubr.f32.mxu0 0.0
    %596 = vmatmul.mubr.f32.gmra.mxu0 %v527
    %v597 = vpop.f32.mrf.mxu0
    %v598 = vadd.f32 0.0, %v597
    %v599 = vpop.f32.mrf.mxu0
    %600 = vdwg.mxu0
    %v601 = vmul.f32 %v519, %v175
    %v602 = vmul.f32 %v598, %v180
    %v603 = vadd.f32 %v601, %v602
    %s604 = scalar_lea.vmem [#allocation2], 40
    %v605 = vld [vmem:[%s604] sm:$0xff]
    %v606 = vadd.f32 %v605, %v603
    %v607 = vsub.f32 %v606, %v188
    %v608 = vmax.f32 %v607, 0.0
    %v609 = vmul.f32 %v527, %v194
    %v610 = vmul.f32 %v608, %v199
    %v611 = vadd.f32 %v609, %v610
    %v612 = vadd.f32 %v611, 0.0
    %613 = vmatprep.subr.mxu0 0.0
    %614 = vmatpush1.msra.mxu0 %v98
    %615 = vmatprep.subr.mxu0 0.0
    %616 = vmatpush1.msra.mxu0 %v97
    %617 = vmatprep.subr.mxu0 0.0
    %618 = vmatpush1.msra.mxu0 %v96
    %619 = vmatprep.subr.mxu0 0.0
    %620 = vmatpush1.msra.mxu0 %v95
    %621 = vmatprep.subr.mxu0 0.0
    %622 = vmatpush1.msra.mxu0 %v94
    %623 = vmatprep.subr.mxu0 0.0
    %624 = vmatpush1.msra.mxu0 %v93
    %625 = vmatprep.subr.mxu0 0.0
    %626 = vmatpush1.msra.mxu0 %v92
    %627 = vmatprep.subr.mxu0 0.0
    %628 = vmatpush1.msra.mxu0 %v91
    %629 = vmatprep.subr.mxu0 0.0
    %630 = vmatpush1.msra.mxu0 %v90
    %631 = vmatprep.subr.mxu0 0.0
    %632 = vmatpush1.msra.mxu0 %v89
    %633 = vmatprep.subr.mxu0 0.0
    %634 = vmatpush1.msra.mxu0 %v88
    %635 = vmatprep.subr.mxu0 0.0
    %636 = vmatpush1.msra.mxu0 %v87
    %637 = vmatprep.subr.mxu0 0.0
    %638 = vmatpush1.msra.mxu0 %v86
    %639 = vmatprep.subr.mxu0 0.0
    %640 = vmatpush1.msra.mxu0 %v85
    %641 = vmatprep.subr.mxu0 0.0
    %642 = vmatpush1.msra.mxu0 %v84
    %643 = vmatprep.subr.mxu0 0.0
    %644 = vmatpush1.msra.mxu0 %v83
    %645 = vmatprep.subr.mxu0 0.0
    %646 = vmatpush2.msra.mxu0 0.0
    %647 = vmatprep.subr.mxu0 0.0
    %648 = vmatpush2.msra.mxu0 0.0
    %649 = vmatprep.subr.mxu0 0.0
    %650 = vmatpush2.msra.mxu0 0.0
    %651 = vmatprep.subr.mxu0 0.0
    %652 = vmatpush2.msra.mxu0 0.0
    %653 = vmatprep.subr.mxu0 0.0
    %654 = vmatpush2.msra.mxu0 0.0
    %655 = vmatprep.subr.mxu0 0.0
    %656 = vmatpush2.msra.mxu0 0.0
    %657 = vmatprep.subr.mxu0 0.0
    %658 = vmatpush2.msra.mxu0 0.0
    %659 = vmatprep.subr.mxu0 0.0
    %660 = vmatpush2.msra.mxu0 0.0
    %661 = vmatprep.subr.mxu0 0.0
    %662 = vmatpush2.msra.mxu0 0.0
    %663 = vmatprep.subr.mxu0 0.0
    %664 = vmatpush2.msra.mxu0 0.0
    %665 = vmatprep.subr.mxu0 0.0
    %666 = vmatpush2.msra.mxu0 0.0
    %667 = vmatprep.subr.mxu0 0.0
    %668 = vmatpush2.msra.mxu0 0.0
    %669 = vmatprep.subr.mxu0 0.0
    %670 = vmatpush2.msra.mxu0 0.0
    %671 = vmatprep.subr.mxu0 0.0
    %672 = vmatpush2.msra.mxu0 0.0
    %673 = vmatprep.subr.mxu0 0.0
    %674 = vmatpush2.msra.mxu0 0.0
    %675 = vmatprep.subr.mxu0 0.0
    %676 = vmatpush2.msra.mxu0 0.0
    %677 = vmatprep.mubr.f32.mxu0 0.0
    %678 = vmatmul.mubr.f32.gmra.mxu0 %v611
    %v679 = vpop.f32.mrf.mxu0
    %v680 = vadd.f32 0.0, %v679
    %v681 = vpop.f32.mrf.mxu0
    %682 = vdwg.mxu0
    %v683 = vmul.f32 %v603, %v175
    %v684 = vmul.f32 %v680, %v180
    %v685 = vadd.f32 %v683, %v684
    %s686 = scalar_lea.vmem [#allocation2], 48
    %v687 = vld [vmem:[%s686] sm:$0xff]
    %v688 = vadd.f32 %v687, %v685
    %v689 = vsub.f32 %v688, %v188
    %v690 = vmax.f32 %v689, 0.0
    %v691 = vmul.f32 %v611, %v194
    %v692 = vmul.f32 %v690, %v199
    %v693 = vadd.f32 %v691, %v692
    %v694 = vadd.f32 %v612, %v693
    %v695 = vmul.f32 %v694, 0.5
    %s696 = scalar_lea.vmem [#allocation11], 8
    %697 = vst [vmem:[%s696] sm:$0xff] %v695
    %698 = vmatprep.subr.mxu0 0.0
    %699 = vmatpush1.msra.mxu0 %v98
    %700 = vmatprep.subr.mxu0 0.0
    %701 = vmatpush1.msra.mxu0 %v97
    %702 = vmatprep.subr.mxu0 0.0
    %703 = vmatpush1.msra.mxu0 %v96
    %704 = vmatprep.subr.mxu0 0.0
    %705 = vmatpush1.msra.mxu0 %v95
    %706 = vmatprep.subr.mxu0 0.0
    %707 = vmatpush1.msra.mxu0 %v94
    %708 = vmatprep.subr.mxu0 0.0
    %709 = vmatpush1.msra.mxu0 %v93
    %710 = vmatprep.subr.mxu0 0.0
    %711 = vmatpush1.msra.mxu0 %v92
    %712 = vmatprep.subr.mxu0 0.0
    %713 = vmatpush1.msra.mxu0 %v91
    %714 = vmatprep.subr.mxu0 0.0
    %715 = vmatpush1.msra.mxu0 %v90
    %716 = vmatprep.subr.mxu0 0.0
    %717 = vmatpush1.msra.mxu0 %v89
    %718 = vmatprep.subr.mxu0 0.0
    %719 = vmatpush1.msra.mxu0 %v88
    %720 = vmatprep.subr.mxu0 0.0
    %721 = vmatpush1.msra.mxu0 %v87
    %722 = vmatprep.subr.mxu0 0.0
    %723 = vmatpush1.msra.mxu0 %v86
    %724 = vmatprep.subr.mxu0 0.0
    %725 = vmatpush1.msra.mxu0 %v85
    %726 = vmatprep.subr.mxu0 0.0
    %727 = vmatpush1.msra.mxu0 %v84
    %728 = vmatprep.subr.mxu0 0.0
    %729 = vmatpush1.msra.mxu0 %v83
    %730 = vmatprep.subr.mxu0 0.0
    %731 = vmatpush2.msra.mxu0 0.0
    %732 = vmatprep.subr.mxu0 0.0
    %733 = vmatpush2.msra.mxu0 0.0
    %734 = vmatprep.subr.mxu0 0.0
    %735 = vmatpush2.msra.mxu0 0.0
    %736 = vmatprep.subr.mxu0 0.0
    %737 = vmatpush2.msra.mxu0 0.0
    %738 = vmatprep.subr.mxu0 0.0
    %739 = vmatpush2.msra.mxu0 0.0
    %740 = vmatprep.subr.mxu0 0.0
    %741 = vmatpush2.msra.mxu0 0.0
    %742 = vmatprep.subr.mxu0 0.0
    %743 = vmatpush2.msra.mxu0 0.0
    %744 = vmatprep.subr.mxu0 0.0
    %745 = vmatpush2.msra.mxu0 0.0
    %746 = vmatprep.subr.mxu0 0.0
    %747 = vmatpush2.msra.mxu0 0.0
    %748 = vmatprep.subr.mxu0 0.0
    %749 = vmatpush2.msra.mxu0 0.0
    %750 = vmatprep.subr.mxu0 0.0
    %751 = vmatpush2.msra.mxu0 0.0
    %752 = vmatprep.subr.mxu0 0.0
    %753 = vmatpush2.msra.mxu0 0.0
    %754 = vmatprep.subr.mxu0 0.0
    %755 = vmatpush2.msra.mxu0 0.0
    %756 = vmatprep.subr.mxu0 0.0
    %757 = vmatpush2.msra.mxu0 0.0
    %758 = vmatprep.subr.mxu0 0.0
    %759 = vmatpush2.msra.mxu0 0.0
    %760 = vmatprep.subr.mxu0 0.0
    %761 = vmatpush2.msra.mxu0 0.0
    %762 = vmatprep.mubr.f32.mxu0 0.0
    %763 = vmatmul.mubr.f32.gmra.mxu0 %v693
    %v764 = vpop.f32.mrf.mxu0
    %v765 = vadd.f32 0.0, %v764
    %v766 = vpop.f32.mrf.mxu0
    %767 = vdwg.mxu0
    %v768 = vmul.f32 %v685, %v175
    %v769 = vmul.f32 %v765, %v180
    %v770 = vadd.f32 %v768, %v769
    %s771 = scalar_lea.vmem [#allocation2], 56
    %v772 = vld [vmem:[%s771] sm:$0xff]
    %v773 = vadd.f32 %v772, %v770
    %v774 = vsub.f32 %v773, %v188
    %v775 = vmax.f32 %v774, 0.0
    %v776 = vmul.f32 %v693, %v194
    %v777 = vmul.f32 %v775, %v199
    %v778 = vadd.f32 %v776, %v777
    %v779 = vadd.f32 %v778, 0.0
    %780 = vmatprep.subr.mxu0 0.0
    %781 = vmatpush1.msra.mxu0 %v98
    %782 = vmatprep.subr.mxu0 0.0
    %783 = vmatpush1.msra.mxu0 %v97
    %784 = vmatprep.subr.mxu0 0.0
    %785 = vmatpush1.msra.mxu0 %v96
    %786 = vmatprep.subr.mxu0 0.0
    %787 = vmatpush1.msra.mxu0 %v95
    %788 = vmatprep.subr.mxu0 0.0
    %789 = vmatpush1.msra.mxu0 %v94
    %790 = vmatprep.subr.mxu0 0.0
    %791 = vmatpush1.msra.mxu0 %v93
    %792 = vmatprep.subr.mxu0 0.0
    %793 = vmatpush1.msra.mxu0 %v92
    %794 = vmatprep.subr.mxu0 0.0
    %795 = vmatpush1.msra.mxu0 %v91
    %796 = vmatprep.subr.mxu0 0.0
    %797 = vmatpush1.msra.mxu0 %v90
    %798 = vmatprep.subr.mxu0 0.0
    %799 = vmatpush1.msra.mxu0 %v89
    %800 = vmatprep.subr.mxu0 0.0
    %801 = vmatpush1.msra.mxu0 %v88
    %802 = vmatprep.subr.mxu0 0.0
    %803 = vmatpush1.msra.mxu0 %v87
    %804 = vmatprep.subr.mxu0 0.0
    %805 = vmatpush1.msra.mxu0 %v86
    %806 = vmatprep.subr.mxu0 0.0
    %807 = vmatpush1.msra.mxu0 %v85
    %808 = vmatprep.subr.mxu0 0.0
    %809 = vmatpush1.msra.mxu0 %v84
    %810 = vmatprep.subr.mxu0 0.0
    %811 = vmatpush1.msra.mxu0 %v83
    %812 = vmatprep.subr.mxu0 0.0
    %813 = vmatpush2.msra.mxu0 0.0
    %814 = vmatprep.subr.mxu0 0.0
    %815 = vmatpush2.msra.mxu0 0.0
    %816 = vmatprep.subr.mxu0 0.0
    %817 = vmatpush2.msra.mxu0 0.0
    %818 = vmatprep.subr.mxu0 0.0
    %819 = vmatpush2.msra.mxu0 0.0
    %820 = vmatprep.subr.mxu0 0.0
    %821 = vmatpush2.msra.mxu0 0.0
    %822 = vmatprep.subr.mxu0 0.0
    %823 = vmatpush2.msra.mxu0 0.0
    %824 = vmatprep.subr.mxu0 0.0
    %825 = vmatpush2.msra.mxu0 0.0
    %826 = vmatprep.subr.mxu0 0.0
    %827 = vmatpush2.msra.mxu0 0.0
    %828 = vmatprep.subr.mxu0 0.0
    %829 = vmatpush2.msra.mxu0 0.0
    %830 = vmatprep.subr.mxu0 0.0
    %831 = vmatpush2.msra.mxu0 0.0
    %832 = vmatprep.subr.mxu0 0.0
    %833 = vmatpush2.msra.mxu0 0.0
    %834 = vmatprep.subr.mxu0 0.0
    %835 = vmatpush2.msra.mxu0 0.0
    %836 = vmatprep.subr.mxu0 0.0
    %837 = vmatpush2.msra.mxu0 0.0
    %838 = vmatprep.subr.mxu0 0.0
    %839 = vmatpush2.msra.mxu0 0.0
    %840 = vmatprep.subr.mxu0 0.0
    %841 = vmatpush2.msra.mxu0 0.0
    %842 = vmatprep.subr.mxu0 0.0
    %843 = vmatpush2.msra.mxu0 0.0
    %844 = vmatprep.mubr.f32.mxu0 0.0
    %845 = vmatmul.mubr.f32.gmra.mxu0 %v778
    %v846 = vpop.f32.mrf.mxu0
    %v847 = vadd.f32 0.0, %v846
    %v848 = vpop.f32.mrf.mxu0
    %849 = vdwg.mxu0
    %v850 = vmul.f32 %v770, %v175
    %v851 = vmul.f32 %v847, %v180
    %v852 = vadd.f32 %v850, %v851
    %s853 = scalar_lea.vmem [#allocation2], 64
    %v854 = vld [vmem:[%s853] sm:$0xff]
    %v855 = vadd.f32 %v854, %v852
    %v856 = vsub.f32 %v855, %v188
    %v857 = vmax.f32 %v856, 0.0
    %v858 = vmul.f32 %v778, %v194
    %v859 = vmul.f32 %v857, %v199
    %v860 = vadd.f32 %v858, %v859
    %v861 = vadd.f32 %v779, %v860
    %v862 = vmul.f32 %v861, 0.5
    %s863 = scalar_lea.vmem [#allocation11], 16
    %864 = vst [vmem:[%s863] sm:$0xff] %v862
    %865 = vmatprep.subr.mxu0 0.0
    %866 = vmatpush1.msra.mxu0 %v98
    %867 = vmatprep.subr.mxu0 0.0
    %868 = vmatpush1.msra.mxu0 %v97
    %869 = vmatprep.subr.mxu0 0.0
    %870 = vmatpush1.msra.mxu0 %v96
    %871 = vmatprep.subr.mxu0 0.0
    %872 = vmatpush1.msra.mxu0 %v95
    %873 = vmatprep.subr.mxu0 0.0
    %874 = vmatpush1.msra.mxu0 %v94
    %875 = vmatprep.subr.mxu0 0.0
    %876 = vmatpush1.msra.mxu0 %v93
    %877 = vmatprep.subr.mxu0 0.0
    %878 = vmatpush1.msra.mxu0 %v92
    %879 = vmatprep.subr.mxu0 0.0
    %880 = vmatpush1.msra.mxu0 %v91
    %881 = vmatprep.subr.mxu0 0.0
    %882 = vmatpush1.msra.mxu0 %v90
    %883 = vmatprep.subr.mxu0 0.0
    %884 = vmatpush1.msra.mxu0 %v89
    %885 = vmatprep.subr.mxu0 0.0
    %886 = vmatpush1.msra.mxu0 %v88
    %887 = vmatprep.subr.mxu0 0.0
    %888 = vmatpush1.msra.mxu0 %v87
    %889 = vmatprep.subr.mxu0 0.0
    %890 = vmatpush1.msra.mxu0 %v86
    %891 = vmatprep.subr.mxu0 0.0
    %892 = vmatpush1.msra.mxu0 %v85
    %893 = vmatprep.subr.mxu0 0.0
    %894 = vmatpush1.msra.mxu0 %v84
    %895 = vmatprep.subr.mxu0 0.0
    %896 = vmatpush1.msra.mxu0 %v83
    %897 = vmatprep.subr.mxu0 0.0
    %898 = vmatpush2.msra.mxu0 0.0
    %899 = vmatprep.subr.mxu0 0.0
    %900 = vmatpush2.msra.mxu0 0.0
    %901 = vmatprep.subr.mxu0 0.0
    %902 = vmatpush2.msra.mxu0 0.0
    %903 = vmatprep.subr.mxu0 0.0
    %904 = vmatpush2.msra.mxu0 0.0
    %905 = vmatprep.subr.mxu0 0.0
    %906 = vmatpush2.msra.mxu0 0.0
    %907 = vmatprep.subr.mxu0 0.0
    %908 = vmatpush2.msra.mxu0 0.0
    %909 = vmatprep.subr.mxu0 0.0
    %910 = vmatpush2.msra.mxu0 0.0
    %911 = vmatprep.subr.mxu0 0.0
    %912 = vmatpush2.msra.mxu0 0.0
    %913 = vmatprep.subr.mxu0 0.0
    %914 = vmatpush2.msra.mxu0 0.0
    %915 = vmatprep.subr.mxu0 0.0
    %916 = vmatpush2.msra.mxu0 0.0
    %917 = vmatprep.subr.mxu0 0.0
    %918 = vmatpush2.msra.mxu0 0.0
    %919 = vmatprep.subr.mxu0 0.0
    %920 = vmatpush2.msra.mxu0 0.0
    %921 = vmatprep.subr.mxu0 0.0
    %922 = vmatpush2.msra.mxu0 0.0
    %923 = vmatprep.subr.mxu0 0.0
    %924 = vmatpush2.msra.mxu0 0.0
    %925 = vmatprep.subr.mxu0 0.0
    %926 = vmatpush2.msra.mxu0 0.0
    %927 = vmatprep.subr.mxu0 0.0
    %928 = vmatpush2.msra.mxu0 0.0
    %929 = vmatprep.mubr.f32.mxu0 0.0
    %930 = vmatmul.mubr.f32.gmra.mxu0 %v860
    %v931 = vpop.f32.mrf.mxu0
    %v932 = vadd.f32 0.0, %v931
    %v933 = vpop.f32.mrf.mxu0
    %934 = vdwg.mxu0
    %v935 = vmul.f32 %v852, %v175
    %v936 = vmul.f32 %v932, %v180
    %v937 = vadd.f32 %v935, %v936
    %s938 = scalar_lea.vmem [#allocation2], 72
    %v939 = vld [vmem:[%s938] sm:$0xff]
    %v940 = vadd.f32 %v939, %v937
    %v941 = vsub.f32 %v940, %v188
    %v942 = vmax.f32 %v941, 0.0
    %v943 = vmul.f32 %v860, %v194
    %v944 = vmul.f32 %v942, %v199
    %v945 = vadd.f32 %v943, %v944
    %v946 = vadd.f32 %v945, 0.0
    %947 = vmatprep.subr.mxu0 0.0
    %948 = vmatpush1.msra.mxu0 %v98
    %949 = vmatprep.subr.mxu0 0.0
    %950 = vmatpush1.msra.mxu0 %v97
    %951 = vmatprep.subr.mxu0 0.0
    %952 = vmatpush1.msra.mxu0 %v96
    %953 = vmatprep.subr.mxu0 0.0
    %954 = vmatpush1.msra.mxu0 %v95
    %955 = vmatprep.subr.mxu0 0.0
    %956 = vmatpush1.msra.mxu0 %v94
    %957 = vmatprep.subr.mxu0 0.0
    %958 = vmatpush1.msra.mxu0 %v93
    %959 = vmatprep.subr.mxu0 0.0
    %960 = vmatpush1.msra.mxu0 %v92
    %961 = vmatprep.subr.mxu0 0.0
    %962 = vmatpush1.msra.mxu0 %v91
    %963 = vmatprep.subr.mxu0 0.0
    %964 = vmatpush1.msra.mxu0 %v90
    %965 = vmatprep.subr.mxu0 0.0
    %966 = vmatpush1.msra.mxu0 %v89
    %967 = vmatprep.subr.mxu0 0.0
    %968 = vmatpush1.msra.mxu0 %v88
    %969 = vmatprep.subr.mxu0 0.0
    %970 = vmatpush1.msra.mxu0 %v87
    %971 = vmatprep.subr.mxu0 0.0
    %972 = vmatpush1.msra.mxu0 %v86
    %973 = vmatprep.subr.mxu0 0.0
    %974 = vmatpush1.msra.mxu0 %v85
    %975 = vmatprep.subr.mxu0 0.0
    %976 = vmatpush1.msra.mxu0 %v84
    %977 = vmatprep.subr.mxu0 0.0
    %978 = vmatpush1.msra.mxu0 %v83
    %979 = vmatprep.subr.mxu0 0.0
    %980 = vmatpush2.msra.mxu0 0.0
    %981 = vmatprep.subr.mxu0 0.0
    %982 = vmatpush2.msra.mxu0 0.0
    %983 = vmatprep.subr.mxu0 0.0
    %984 = vmatpush2.msra.mxu0 0.0
    %985 = vmatprep.subr.mxu0 0.0
    %986 = vmatpush2.msra.mxu0 0.0
    %987 = vmatprep.subr.mxu0 0.0
    %988 = vmatpush2.msra.mxu0 0.0
    %989 = vmatprep.subr.mxu0 0.0
    %990 = vmatpush2.msra.mxu0 0.0
    %991 = vmatprep.subr.mxu0 0.0
    %992 = vmatpush2.msra.mxu0 0.0
    %993 = vmatprep.subr.mxu0 0.0
    %994 = vmatpush2.msra.mxu0 0.0
    %995 = vmatprep.subr.mxu0 0.0
    %996 = vmatpush2.msra.mxu0 0.0
    %997 = vmatprep.subr.mxu0 0.0
    %998 = vmatpush2.msra.mxu0 0.0
    %999 = vmatprep.subr.mxu0 0.0
    %1000 = vmatpush2.msra.mxu0 0.0
    %1001 = vmatprep.subr.mxu0 0.0
    %1002 = vmatpush2.msra.mxu0 0.0
    %1003 = vmatprep.subr.mxu0 0.0
    %1004 = vmatpush2.msra.mxu0 0.0
    %1005 = vmatprep.subr.mxu0 0.0
    %1006 = vmatpush2.msra.mxu0 0.0
    %1007 = vmatprep.subr.mxu0 0.0
    %1008 = vmatpush2.msra.mxu0 0.0
    %1009 = vmatprep.subr.mxu0 0.0
    %1010 = vmatpush2.msra.mxu0 0.0
    %1011 = vmatprep.mubr.f32.mxu0 0.0
    %1012 = vmatmul.mubr.f32.gmra.mxu0 %v945
    %v1013 = vpop.f32.mrf.mxu0
    %v1014 = vadd.f32 0.0, %v1013
    %v1015 = vpop.f32.mrf.mxu0
    %1016 = vdwg.mxu0
    %v1017 = vmul.f32 %v937, %v175
    %v1018 = vmul.f32 %v1014, %v180
    %v1019 = vadd.f32 %v1017, %v1018
    %s1020 = scalar_lea.vmem [#allocation2], 80
    %v1021 = vld [vmem:[%s1020] sm:$0xff]
    %v1022 = vadd.f32 %v1021, %v1019
    %v1023 = vsub.f32 %v1022, %v188
    %v1024 = vmax.f32 %v1023, 0.0
    %v1025 = vmul.f32 %v945, %v194
    %v1026 = vmul.f32 %v1024, %v199
    %v1027 = vadd.f32 %v1025, %v1026
    %v1028 = vadd.f32 %v946, %v1027
    %v1029 = vmul.f32 %v1028, 0.5
    %s1030 = scalar_lea.vmem [#allocation11], 24
    %1031 = vst [vmem:[%s1030] sm:$0xff] %v1029
    // Predicated region
    $region42: #{tpu_custom_call.1} parent=1 // pred_check
      _
    $region43: #{tpu_custom_call.1} parent=1 // pred_check_branch
      %1033 = sbr.rel (0) target = $region45
    $region44: #{tpu_custom_call.1} parent=1 // pred_region
      %s1035 = ssub.s32 512, 512
      %1036 = vsyncadd [#allocation4], %s1035
      %s1037 = sshll.u32 [#allocation11], 4
      %s1038 = int_to_ptr.vmem [resolvable:$true] %s1037
      %1043 = dma.vmem_to_hbm [thread:$0]  %s1038, 512, %s5, [#allocation4], 128, 128, 8
    $region45: #{tpu_custom_call.1} parent=1 // pred_fallthru
      _
    // Predicated region
    $region46: #{tpu_custom_call.1} parent=1 // pred_check
      _
    $region47: #{tpu_custom_call.1} parent=1 // pred_check_branch
      %1045 = sbr.rel (0) target = $region49
    $region48: #{tpu_custom_call.1} parent=1 // pred_region
      %1046 = dma.done [#allocation4], 512
    $region49: #{tpu_custom_call.1} parent=1 // pred_fallthru
      _
    %1047 = vsyncpa [#allocation3], 1
    %1048 = vsyncpa [#allocation6], 1
    %1049 = vsyncpa [#allocation9], 1
    %1050 = vsyncpa [#allocation4], 1

</llo_original>
